<compile_context>
chip_gen: v7x
topology: tpu7x:2x2x1
jax: 0.10.0
libtpu: 0.0.40
codegen_flags: <defaults>
</compile_context>

<pallas_src>
import functools

import jax
import jax.numpy as jnp
from jax.experimental import pallas as pl
from jax.experimental.pallas import tpu as pltpu


INPUT_SIZE = 27
HIDDEN_SIZE = 256
OUTPUT_SIZE = 9
LANE = 128           # padded output feature dim (lane-dense stores)
NEG_BIG = -1e30      # bias padding value -> exp() underflows to exactly 0.0


def _round_up(n, m):
    return ((n + m - 1) // m) * m


def policy_kernel(x_ref, w1_ref, b1_ref, w2_ref, b2_ref, out_ref):
    x = x_ref[...]                                   # (TB, 27) f32

    # affine1 + ReLU -> (TB, 256)
    h = jnp.dot(x, w1_ref[...], preferred_element_type=jnp.float32) + b1_ref[...]
    h = jnp.maximum(h, 0.0)

    # affine2 -> (TB, 128)  (cols 9..127 carry NEG_BIG from the padded bias)
    s = jnp.dot(h, w2_ref[...], preferred_element_type=jnp.float32) + b2_ref[...]

    # numerically-stable softmax over the feature axis; pad lanes contribute 0
    m = jnp.max(s, axis=1, keepdims=True)
    e = jnp.exp(s - m)
    denom = jnp.sum(e, axis=1, keepdims=True)
    out_ref[...] = e * pl.reciprocal(denom, approx=True)


@functools.partial(jax.jit, static_argnames=("tb",))
def policy_forward(x, w1, b1, w2p, b2p, *, tb=256):
    """x: (B, 27) f32.  w2p/b2p are lane-padded to width LANE.
    Returns (B, OUTPUT_SIZE) softmax probabilities."""
    B, in_size = x.shape
    hid = w1.shape[1]
    out_pad = w2p.shape[1]

    # Batch tile: multiple of 8 sublanes, capped at `tb`; pad B up to a multiple.
    TB = min(tb, _round_up(B, 8))
    Bp = _round_up(B, TB)
    if Bp != B:
        x = jnp.pad(x, ((0, Bp - B), (0, 0)))

    out = pl.pallas_call(
        policy_kernel,
        out_shape=jax.ShapeDtypeStruct((Bp, out_pad), jnp.float32),
        grid=(Bp // TB,),
        in_specs=[
            pl.BlockSpec((TB, in_size), lambda i: (i, 0)),       # x: batch-tiled
            pl.BlockSpec((in_size, hid), lambda i: (0, 0)),      # W1: resident
            pl.BlockSpec((1, hid), lambda i: (0, 0)),            # b1: resident
            pl.BlockSpec((hid, out_pad), lambda i: (0, 0)),      # W2 (padded)
            pl.BlockSpec((1, out_pad), lambda i: (0, 0)),        # b2 (padded)
        ],
        out_specs=pl.BlockSpec((TB, out_pad), lambda i: (i, 0)),
        compiler_params=pltpu.CompilerParams(
            dimension_semantics=("parallel",),
        ),
    )(x, w1, b1, w2p, b2p)

    # Drop batch padding and lane padding.
    return out[:B, :OUTPUT_SIZE]


def init_params(key, input_size=INPUT_SIZE, hidden_size=HIDDEN_SIZE,
                output_size=OUTPUT_SIZE):
    """PyTorch nn.Linear-style init (U[-1/sqrt(in), 1/sqrt(in)]).
    Weights are stored pre-transposed as (in, out)."""
    k1, k2, k3, k4 = jax.random.split(key, 4)
    bound1 = 1.0 / jnp.sqrt(jnp.float32(input_size))
    bound2 = 1.0 / jnp.sqrt(jnp.float32(hidden_size))
    w1 = jax.random.uniform(k1, (input_size, hidden_size), jnp.float32, -bound1, bound1)
    b1 = jax.random.uniform(k2, (1, hidden_size), jnp.float32, -bound1, bound1)
    w2 = jax.random.uniform(k3, (hidden_size, output_size), jnp.float32, -bound2, bound2)
    b2 = jax.random.uniform(k4, (1, output_size), jnp.float32, -bound2, bound2)
    return w1, b1, w2, b2


def pad_layer2(w2, b2, lane=LANE):
    """Pad the output feature dim to `lane` lanes: zero weight columns and
    NEG_BIG bias columns so padded lanes vanish under exp()."""
    hid, out = w2.shape
    w2p = jnp.zeros((hid, lane), jnp.float32).at[:, :out].set(w2)
    b2p = jnp.full((1, lane), NEG_BIG, jnp.float32).at[:, :out].set(b2)
    return w2p, b2p


if __name__ == "__main__":
    key = jax.random.PRNGKey(0)
    kx, kp = jax.random.split(key)

    batch = 2
    x = jax.random.normal(kx, (batch, INPUT_SIZE), jnp.float32)
    w1, b1, w2, b2 = init_params(kp)
    w2p, b2p = pad_layer2(w2, b2)

    out = policy_forward(x, w1, b1, w2p, b2p)
    out = jax.block_until_ready(out)

    # sanity check against pure-JAX reference (unpadded weights)
    h_ref = jnp.maximum(x @ w1 + b1, 0.0)
    ref = jax.nn.softmax(h_ref @ w2 + b2, axis=1)
    assert out.shape == (batch, OUTPUT_SIZE)
    # approx reciprocal on the softmax denom -> tolerance relaxed to 1e-3
    assert jnp.allclose(out, ref, atol=1e-3, rtol=1e-3)
    assert jnp.allclose(jnp.sum(out, axis=1), 1.0, atol=1e-3)

    print("KERNEL_OK")
</pallas_src>

<mosaic_0001>
module attributes {stable_mosaic.version = 11 : i64} {
  func.func @policy_kernel(%arg0: i32, %arg1: memref<8x27xf32, #tpu.memory_space<vmem>>, %arg2: memref<27x256xf32, #tpu.memory_space<vmem>>, %arg3: memref<1x256xf32, #tpu.memory_space<vmem>>, %arg4: memref<256x128xf32, #tpu.memory_space<vmem>>, %arg5: memref<1x128xf32, #tpu.memory_space<vmem>>, %arg6: memref<8x128xf32, #tpu.memory_space<vmem>>) attributes {dimension_semantics = [#tpu.dimension_semantics<parallel>], iteration_bounds = array<i64: 1>, scalar_prefetch = 0 : i64, scratch_operands = 0 : i64, tpu.core_type = #tpu.core_type<tc>, window_params = [{transform_indices = @transform_0, window_bounds = array<i64: 8, 27>}, {pipeline_mode = #tpu.pipeline_mode<synchronous>, transform_indices = @transform_1, window_bounds = array<i64: 27, 256>}, {pipeline_mode = #tpu.pipeline_mode<synchronous>, transform_indices = @transform_2, window_bounds = array<i64: 1, 256>}, {pipeline_mode = #tpu.pipeline_mode<synchronous>, transform_indices = @transform_3, window_bounds = array<i64: 256, 128>}, {pipeline_mode = #tpu.pipeline_mode<synchronous>, transform_indices = @transform_4, window_bounds = array<i64: 1, 128>}, {transform_indices = @transform_5, window_bounds = array<i64: 8, 128>}]} {
    %c0 = arith.constant 0 : index
    %c0_0 = arith.constant 0 : index
    %0 = vector.load %arg1[%c0, %c0_0] : memref<8x27xf32, #tpu.memory_space<vmem>>, vector<8x27xf32>
    %c0_1 = arith.constant 0 : index
    %c0_2 = arith.constant 0 : index
    %1 = vector.load %arg2[%c0_1, %c0_2] : memref<27x256xf32, #tpu.memory_space<vmem>>, vector<27x256xf32>
    %cst = arith.constant dense<0.000000e+00> : vector<8x256xf32>
    %2 = tpu.matmul %0, %1, %cst {dimension_numbers = #tpu.dot_dimension_numbers<[1], [0], [0], [1], [0, 0, 1, 1], [], []>} : vector<8x27xf32>, vector<27x256xf32>, vector<8x256xf32> -> vector<8x256xf32>
    %c0_3 = arith.constant 0 : index
    %c0_4 = arith.constant 0 : index
    %3 = vector.load %arg3[%c0_3, %c0_4] : memref<1x256xf32, #tpu.memory_space<vmem>>, vector<1x256xf32>
    %4 = vector.broadcast %3 : vector<1x256xf32> to vector<8x256xf32>
    %5 = arith.addf %2, %4 : vector<8x256xf32>
    %cst_5 = arith.constant 0.000000e+00 : f32
    %6 = vector.broadcast %cst_5 : f32 to vector<8x256xf32>
    %7 = arith.maximumf %5, %6 : vector<8x256xf32>
    %c0_6 = arith.constant 0 : index
    %c0_7 = arith.constant 0 : index
    %8 = vector.load %arg4[%c0_6, %c0_7] : memref<256x128xf32, #tpu.memory_space<vmem>>, vector<256x128xf32>
    %cst_8 = arith.constant dense<0.000000e+00> : vector<8x128xf32>
    %9 = tpu.matmul %7, %8, %cst_8 {dimension_numbers = #tpu.dot_dimension_numbers<[1], [0], [0], [1], [0, 0, 1, 1], [], []>} : vector<8x256xf32>, vector<256x128xf32>, vector<8x128xf32> -> vector<8x128xf32>
    %c0_9 = arith.constant 0 : index
    %c0_10 = arith.constant 0 : index
    %10 = vector.load %arg5[%c0_9, %c0_10] : memref<1x128xf32, #tpu.memory_space<vmem>>, vector<1x128xf32>
    %11 = vector.broadcast %10 : vector<1x128xf32> to vector<8x128xf32>
    %12 = arith.addf %9, %11 : vector<8x128xf32>
    %cst_11 = arith.constant dense<0xFF800000> : vector<8xf32>
    %13 = vector.multi_reduction <maximumf>, %12, %cst_11 [1] : vector<8x128xf32> to vector<8xf32>
    %14 = vector.shape_cast %13 : vector<8xf32> to vector<8x1xf32>
    %15 = vector.broadcast %14 : vector<8x1xf32> to vector<8x128xf32>
    %16 = arith.subf %12, %15 : vector<8x128xf32>
    %17 = math.exp %16 : vector<8x128xf32>
    %cst_12 = arith.constant dense<0.000000e+00> : vector<8xf32>
    %18 = vector.multi_reduction <add>, %17, %cst_12 [1] : vector<8x128xf32> to vector<8xf32>
    %19 = vector.shape_cast %18 : vector<8xf32> to vector<8x1xf32>
    %20 = tpu.reciprocal %19 {approx = true} : vector<8x1xf32> -> vector<8x1xf32>
    %21 = vector.broadcast %20 : vector<8x1xf32> to vector<8x128xf32>
    %22 = arith.mulf %17, %21 : vector<8x128xf32>
    %c0_13 = arith.constant 0 : index
    %c0_14 = arith.constant 0 : index
    %23 = vector.load %arg6[%c0_13, %c0_14] : memref<8x128xf32, #tpu.memory_space<vmem>>, vector<8x128xf32>
    tpu.vector_store %arg6[%c0_13, %c0_14], %22 {strides = array<i32>} : memref<8x128xf32, #tpu.memory_space<vmem>>, vector<8x128xf32>,
    return
  }
  func.func @transform_0(%arg0: i32) -> (i32, i32) {
    %c0_i32 = arith.constant 0 : i32
    %c0_i32_0 = arith.constant 0 : i32
    return %arg0, %c0_i32 : i32, i32
  }
  func.func @transform_1(%arg0: i32) -> (i32, i32) {
    %c0_i32 = arith.constant 0 : i32
    %c0_i32_0 = arith.constant 0 : i32
    %c0_i32_1 = arith.constant 0 : i32
    return %c0_i32, %c0_i32_0 : i32, i32
  }
  func.func @transform_2(%arg0: i32) -> (i32, i32) {
    %c0_i32 = arith.constant 0 : i32
    %c0_i32_0 = arith.constant 0 : i32
    %c0_i32_1 = arith.constant 0 : i32
    return %c0_i32, %c0_i32_0 : i32, i32
  }
  func.func @transform_3(%arg0: i32) -> (i32, i32) {
    %c0_i32 = arith.constant 0 : i32
    %c0_i32_0 = arith.constant 0 : i32
    %c0_i32_1 = arith.constant 0 : i32
    return %c0_i32, %c0_i32_0 : i32, i32
  }
  func.func @transform_4(%arg0: i32) -> (i32, i32) {
    %c0_i32 = arith.constant 0 : i32
    %c0_i32_0 = arith.constant 0 : i32
    %c0_i32_1 = arith.constant 0 : i32
    return %c0_i32, %c0_i32_0 : i32, i32
  }
  func.func @transform_5(%arg0: i32) -> (i32, i32) {
    %c0_i32 = arith.constant 0 : i32
    %c0_i32_0 = arith.constant 0 : i32
    return %arg0, %c0_i32 : i32, i32
  }
}

</mosaic_0001>

<llo_original>
// kernel: policy_forward.1
$region0: #{policy_forward.1}
  #allocation0 [shape = 'u32[]', space=smem, size = 0x4, offset = 0x4, fixed_abs, tag = 'smem constant byte address 0x4 - core index']
  #allocation1 [shape = 'u32[144,128]{1,0:T(1,128)}', space=vmem, size = 0x12000, scoped, tag = 'internal scratch']
  %s0 = inlined_call_operand.vmem [shape: f32[8,27], index: 0, kind: input, shape index: {}]
  %s1 = inlined_call_operand.hbm [shape: f32[27,256], index: 1, kind: input, shape index: {}]
  %s2 = inlined_call_operand.vmem [shape: f32[1,256], index: 2, kind: input, shape index: {}]
  %s3 = inlined_call_operand.hbm [shape: f32[256,128], index: 3, kind: input, shape index: {}]
  %s4 = inlined_call_operand.vmem [shape: f32[1,128], index: 4, kind: input, shape index: {}]
  %s5 = inlined_call_operand.vmem [shape: f32[8,128], index: 5, kind: output, shape index: {}]
  %s6 = sld [smem:[#allocation0]]
  $region38: #{policy_forward.1} parent=0
    _
  %s8 = ssub.s32 1, %s6
  %s9 = scalar_select 0, %s8, %s6
  $region1: #{policy_forward.1} parent=0
    #allocation2 [shape = 'u8[32768]{0}', space=vmem, size = 0x8000, scoped, tag = 'input window, operand 1, single buffered']
    #allocation3 [shape = 's32[1]{0}', space=sflag, size = 0x4, scoped, tag = 'scoped memory for policy_forward.1']
    #allocation4 [shape = 'u8[131072]{0}', space=vmem, size = 0x20000, scoped, tag = 'input window, operand 3, single buffered']
    #allocation5 [shape = 's32[1]{0}', space=sflag, size = 0x4, scoped, tag = 'scoped memory for policy_forward.1']
    %10 = vsyncpa [#allocation3], 0
    %11 = vsyncpa [#allocation5], 0
    // Predicated region
    $region2: #{policy_forward.1} parent=1 // pred_check
      _
    $region3: #{policy_forward.1} parent=1 // pred_check_branch
      %13 = sbr.rel (0) target = $region5
    $region4: #{policy_forward.1} parent=1 // pred_region
      _
    $region5: #{policy_forward.1} parent=1 // pred_fallthru
      _
    // Predicated region
    $region6: #{policy_forward.1} parent=1 // pred_check
      _
    $region7: #{policy_forward.1} parent=1 // pred_check_branch
      %15 = sbr.rel (0) target = $region9
    $region8: #{policy_forward.1} parent=1 // pred_region
      %s17 = ssub.s32 1024, 1024
      %18 = vsyncadd [#allocation3], %s17
      %s19 = sshll.u32 [#allocation2], 4
      %s20 = int_to_ptr.vmem [resolvable:$true] %s19
      %25 = dma.hbm_to_vmem [thread:$0]  %s1, 1024, %s20, [#allocation3], 256, 256, 16
    $region9: #{policy_forward.1} parent=1 // pred_fallthru
      _
    // Predicated region
    $region10: #{policy_forward.1} parent=1 // pred_check
      _
    $region11: #{policy_forward.1} parent=1 // pred_check_branch
      %27 = sbr.rel (0) target = $region13
    $region12: #{policy_forward.1} parent=1 // pred_region
      _
    $region13: #{policy_forward.1} parent=1 // pred_fallthru
      _
    // Predicated region
    $region14: #{policy_forward.1} parent=1 // pred_check
      _
    $region15: #{policy_forward.1} parent=1 // pred_check_branch
      %29 = sbr.rel (0) target = $region17
    $region16: #{policy_forward.1} parent=1 // pred_region
      %s31 = ssub.s32 4096, 4096
      %32 = vsyncadd [#allocation5], %s31
      %s33 = sshll.u32 [#allocation4], 4
      %s34 = int_to_ptr.vmem [resolvable:$true] %s33
      %39 = dma.hbm_to_vmem [thread:$0]  %s3, 4096, %s34, [#allocation5], 128, 128, 8
    $region17: #{policy_forward.1} parent=1 // pred_fallthru
      _
    // Predicated region
    $region18: #{policy_forward.1} parent=1 // pred_check
      _
    $region19: #{policy_forward.1} parent=1 // pred_check_branch
      %41 = sbr.rel (0) target = $region21
    $region20: #{policy_forward.1} parent=1 // pred_region
      _
    $region21: #{policy_forward.1} parent=1 // pred_fallthru
      _
    // Predicated region
    $region22: #{policy_forward.1} parent=1 // pred_check
      _
    $region23: #{policy_forward.1} parent=1 // pred_check_branch
      %43 = sbr.rel (0) target = $region25
    $region24: #{policy_forward.1} parent=1 // pred_region
      %44 = dma.done [#allocation3], 1024
    $region25: #{policy_forward.1} parent=1 // pred_fallthru
      _
    // Predicated region
    $region26: #{policy_forward.1} parent=1 // pred_check
      _
    $region27: #{policy_forward.1} parent=1 // pred_check_branch
      %46 = sbr.rel (0) target = $region29
    $region28: #{policy_forward.1} parent=1 // pred_region
      %47 = dma.done [#allocation5], 4096
    $region29: #{policy_forward.1} parent=1 // pred_fallthru
      _
    %v48 = vld [vmem:[%s0] sm:$0xff]
    %v49 = vld [vmem:[#allocation2] sm:$0xff]
    %v50 = vld [vmem:[#allocation2 + $0x8] sm:$0xff]
    %v51 = vld [vmem:[#allocation2 + $0x10] sm:$0xff]
    %v52 = vld [vmem:[#allocation2 + $0x18] sm:$0xff]
    %v53 = vld [vmem:[#allocation2 + $0x20] sm:$0xff]
    %v54 = vld [vmem:[#allocation2 + $0x28] sm:$0xff]
    %v55 = vld [vmem:[#allocation2 + $0x30] sm:$0x7]
    %v56 = vld [vmem:[#allocation2 + $0x38] sm:$0x7]
    %v57 = vld [vmem:[%s2] sm:$0x3]
    %v59 = vlaneseq
    %v60 = vshrl.u32 %v59, 7
    %v61 = vsub.s32 0, %v60
    %v62 = vrot.slane %v57, %v61
    %v63 = vlaneseq
    %v64 = vshrl.u32 %v63, 7
    %v65 = vsub.s32 1, %v64
    %v66 = vrot.slane %v57, %v65
    %vm69 = vcmask 220160
    %v71 = vsel %vm69, %v48, 0
    %vm73 = vcmask 1042432
    %v75 = vsel %vm73, %v55, 0
    %v78 = vsel %vm73, %v56, 0
    %80 = vmatprep.subr.mxu0 %v50
    %81 = vmatpush1.msra.mxu0 %v49
    %82 = vmatprep.subr.mxu0 %v52
    %83 = vmatpush1.msra.mxu0 %v51
    %84 = vmatprep.subr.mxu0 %v54
    %85 = vmatpush1.msra.mxu0 %v53
    %86 = vmatprep.subr.mxu0 %v78
    %87 = vmatpush1.msra.mxu0 %v75
    %88 = vmatprep.subr.mxu0 0.0
    %89 = vmatpush1.msra.mxu0 0.0
    %90 = vmatprep.subr.mxu0 0.0
    %91 = vmatpush1.msra.mxu0 0.0
    %92 = vmatprep.subr.mxu0 0.0
    %93 = vmatpush1.msra.mxu0 0.0
    %94 = vmatprep.subr.mxu0 0.0
    %95 = vmatpush1.msra.mxu0 0.0
    %96 = vmatprep.subr.mxu0 0.0
    %97 = vmatpush1.msra.mxu0 0.0
    %98 = vmatprep.subr.mxu0 0.0
    %99 = vmatpush1.msra.mxu0 0.0
    %100 = vmatprep.subr.mxu0 0.0
    %101 = vmatpush1.msra.mxu0 0.0
    %102 = vmatprep.subr.mxu0 0.0
    %103 = vmatpush1.msra.mxu0 0.0
    %104 = vmatprep.subr.mxu0 0.0
    %105 = vmatpush1.msra.mxu0 0.0
    %106 = vmatprep.subr.mxu0 0.0
    %107 = vmatpush1.msra.mxu0 0.0
    %108 = vmatprep.subr.mxu0 0.0
    %109 = vmatpush1.msra.mxu0 0.0
    %110 = vmatprep.subr.mxu0 0.0
    %111 = vmatpush1.msra.mxu0 0.0
    %112 = vmatprep.subr.mxu0 0.0
    %113 = vmatpush1.msra.mxu0 0.0
    %114 = vmatprep.subr.mxu0 0.0
    %115 = vmatpush1.msra.mxu0 0.0
    %116 = vmatprep.subr.mxu0 0.0
    %117 = vmatpush1.msra.mxu0 0.0
    %118 = vmatprep.subr.mxu0 0.0
    %119 = vmatpush1.msra.mxu0 0.0
    %120 = vmatprep.subr.mxu0 0.0
    %121 = vmatpush1.msra.mxu0 0.0
    %122 = vmatprep.subr.mxu0 0.0
    %123 = vmatpush1.msra.mxu0 0.0
    %124 = vmatprep.subr.mxu0 0.0
    %125 = vmatpush1.msra.mxu0 0.0
    %126 = vmatprep.subr.mxu0 0.0
    %127 = vmatpush1.msra.mxu0 0.0
    %128 = vmatprep.subr.mxu0 0.0
    %129 = vmatpush1.msra.mxu0 0.0
    %130 = vmatprep.subr.mxu0 0.0
    %131 = vmatpush1.msra.mxu0 0.0
    %132 = vmatprep.subr.mxu0 0.0
    %133 = vmatpush1.msra.mxu0 0.0
    %134 = vmatprep.subr.mxu0 0.0
    %135 = vmatpush1.msra.mxu0 0.0
    %136 = vmatprep.subr.mxu0 0.0
    %137 = vmatpush1.msra.mxu0 0.0
    %138 = vmatprep.subr.mxu0 0.0
    %139 = vmatpush1.msra.mxu0 0.0
    %140 = vmatprep.subr.mxu0 0.0
    %141 = vmatpush1.msra.mxu0 0.0
    %142 = vmatprep.subr.mxu0 0.0
    %143 = vmatpush1.msra.mxu0 0.0
    %144 = vmatprep.mubr.f32.mxu0 0.0
    %145 = vmatmul.mubr.f32.gmra.mrb[0].mxu0 %v71
    %v146 = vpop.f32.mrb[0].mxu0
    %v147 = vadd.f32 %v62, %v146
    %v148 = vpop.f32.mrb[0].mxu0
    %v149 = vadd.f32 %v66, %v148
    %150 = vdwg.mxu0
    %v151 = vmax.f32 %v147, 0.0
    %v152 = vmax.f32 %v149, 0.0
    %v153 = vld [vmem:[#allocation4] sm:$0xff]
    %v154 = vld [vmem:[#allocation4 + $0x8] sm:$0xff]
    %v155 = vld [vmem:[#allocation4 + $0x10] sm:$0xff]
    %v156 = vld [vmem:[#allocation4 + $0x18] sm:$0xff]
    %v157 = vld [vmem:[#allocation4 + $0x20] sm:$0xff]
    %v158 = vld [vmem:[#allocation4 + $0x28] sm:$0xff]
    %v159 = vld [vmem:[#allocation4 + $0x30] sm:$0xff]
    %v160 = vld [vmem:[#allocation4 + $0x38] sm:$0xff]
    %v161 = vld [vmem:[#allocation4 + $0x40] sm:$0xff]
    %v162 = vld [vmem:[#allocation4 + $0x48] sm:$0xff]
    %v163 = vld [vmem:[#allocation4 + $0x50] sm:$0xff]
    %v164 = vld [vmem:[#allocation4 + $0x58] sm:$0xff]
    %v165 = vld [vmem:[#allocation4 + $0x60] sm:$0xff]
    %v166 = vld [vmem:[#allocation4 + $0x68] sm:$0xff]
    %v167 = vld [vmem:[#allocation4 + $0x70] sm:$0xff]
    %v168 = vld [vmem:[#allocation4 + $0x78] sm:$0xff]
    %v169 = vld [vmem:[#allocation4 + $0x80] sm:$0xff]
    %v170 = vld [vmem:[#allocation4 + $0x88] sm:$0xff]
    %v171 = vld [vmem:[#allocation4 + $0x90] sm:$0xff]
    %v172 = vld [vmem:[#allocation4 + $0x98] sm:$0xff]
    %v173 = vld [vmem:[#allocation4 + $0xa0] sm:$0xff]
    %v174 = vld [vmem:[#allocation4 + $0xa8] sm:$0xff]
    %v175 = vld [vmem:[#allocation4 + $0xb0] sm:$0xff]
    %v176 = vld [vmem:[#allocation4 + $0xb8] sm:$0xff]
    %v177 = vld [vmem:[#allocation4 + $0xc0] sm:$0xff]
    %v178 = vld [vmem:[#allocation4 + $0xc8] sm:$0xff]
    %v179 = vld [vmem:[#allocation4 + $0xd0] sm:$0xff]
    %v180 = vld [vmem:[#allocation4 + $0xd8] sm:$0xff]
    %v181 = vld [vmem:[#allocation4 + $0xe0] sm:$0xff]
    %v182 = vld [vmem:[#allocation4 + $0xe8] sm:$0xff]
    %v183 = vld [vmem:[#allocation4 + $0xf0] sm:$0xff]
    %v184 = vld [vmem:[#allocation4 + $0xf8] sm:$0xff]
    %v185 = vld [vmem:[%s4] sm:$0x1]
    %v187 = vlaneseq
    %v188 = vshrl.u32 %v187, 7
    %v189 = vsub.s32 0, %v188
    %v190 = vrot.slane %v185, %v189
    %192 = vmatprep.subr.mxu0 0.0
    %193 = vmatpush1.msra.mxu0 %v153
    %194 = vmatprep.subr.mxu0 0.0
    %195 = vmatpush1.msra.mxu0 %v154
    %196 = vmatprep.subr.mxu0 0.0
    %197 = vmatpush1.msra.mxu0 %v155
    %198 = vmatprep.subr.mxu0 0.0
    %199 = vmatpush1.msra.mxu0 %v156
    %200 = vmatprep.subr.mxu0 0.0
    %201 = vmatpush1.msra.mxu0 %v157
    %202 = vmatprep.subr.mxu0 0.0
    %203 = vmatpush1.msra.mxu0 %v158
    %204 = vmatprep.subr.mxu0 0.0
    %205 = vmatpush1.msra.mxu0 %v159
    %206 = vmatprep.subr.mxu0 0.0
    %207 = vmatpush1.msra.mxu0 %v160
    %208 = vmatprep.subr.mxu0 0.0
    %209 = vmatpush1.msra.mxu0 %v161
    %210 = vmatprep.subr.mxu0 0.0
    %211 = vmatpush1.msra.mxu0 %v162
    %212 = vmatprep.subr.mxu0 0.0
    %213 = vmatpush1.msra.mxu0 %v163
    %214 = vmatprep.subr.mxu0 0.0
    %215 = vmatpush1.msra.mxu0 %v164
    %216 = vmatprep.subr.mxu0 0.0
    %217 = vmatpush1.msra.mxu0 %v165
    %218 = vmatprep.subr.mxu0 0.0
    %219 = vmatpush1.msra.mxu0 %v166
    %220 = vmatprep.subr.mxu0 0.0
    %221 = vmatpush1.msra.mxu0 %v167
    %222 = vmatprep.subr.mxu0 0.0
    %223 = vmatpush1.msra.mxu0 %v168
    %224 = vmatprep.subr.mxu0 0.0
    %225 = vmatpush1.msra.mxu0 %v169
    %226 = vmatprep.subr.mxu0 0.0
    %227 = vmatpush1.msra.mxu0 %v170
    %228 = vmatprep.subr.mxu0 0.0
    %229 = vmatpush1.msra.mxu0 %v171
    %230 = vmatprep.subr.mxu0 0.0
    %231 = vmatpush1.msra.mxu0 %v172
    %232 = vmatprep.subr.mxu0 0.0
    %233 = vmatpush1.msra.mxu0 %v173
    %234 = vmatprep.subr.mxu0 0.0
    %235 = vmatpush1.msra.mxu0 %v174
    %236 = vmatprep.subr.mxu0 0.0
    %237 = vmatpush1.msra.mxu0 %v175
    %238 = vmatprep.subr.mxu0 0.0
    %239 = vmatpush1.msra.mxu0 %v176
    %240 = vmatprep.subr.mxu0 0.0
    %241 = vmatpush1.msra.mxu0 %v177
    %242 = vmatprep.subr.mxu0 0.0
    %243 = vmatpush1.msra.mxu0 %v178
    %244 = vmatprep.subr.mxu0 0.0
    %245 = vmatpush1.msra.mxu0 %v179
    %246 = vmatprep.subr.mxu0 0.0
    %247 = vmatpush1.msra.mxu0 %v180
    %248 = vmatprep.subr.mxu0 0.0
    %249 = vmatpush1.msra.mxu0 %v181
    %250 = vmatprep.subr.mxu0 0.0
    %251 = vmatpush1.msra.mxu0 %v182
    %252 = vmatprep.subr.mxu0 0.0
    %253 = vmatpush1.msra.mxu0 %v183
    %254 = vmatprep.subr.mxu0 0.0
    %255 = vmatpush1.msra.mxu0 %v184
    %256 = vmatprep.mubr.f32.mxu0 %v152
    %257 = vmatmul.mubr.f32.gmra.mrb[0].mxu0 %v151
    %v258 = vpop.f32.mrb[0].mxu0
    %v259 = vadd.f32 %v190, %v258
    %v260 = vpop.f32.mrb[0].mxu0
    %261 = vdwg.mxu0
    %262 = vmax.xlane.f32.xlu0 %v259
    %v263 = vpop.xlane.xlu0 %262
    %v264 = vsub.f32 %v259, %v263
    %v265 = vmul.f32 %v264, 1.442695
    %v266 = vpow.pop %v265
    %267 = vadd.xlane.f32.xlu0 %v266
    %v268 = vpop.xlane.xlu0 %267
    %v269 = vrcp.pop %v268
    %v270 = vmul.f32 %v266, %v269
    %271 = vst [vmem:[%s5] sm:$0xff] %v270
    // Predicated region
    $region30: #{policy_forward.1} parent=1 // pred_check
      _
    $region31: #{policy_forward.1} parent=1 // pred_check_branch
      %273 = sbr.rel (0) target = $region33
    $region32: #{policy_forward.1} parent=1 // pred_region
      _
    $region33: #{policy_forward.1} parent=1 // pred_fallthru
      _
    // Predicated region
    $region34: #{policy_forward.1} parent=1 // pred_check
      _
    $region35: #{policy_forward.1} parent=1 // pred_check_branch
      %275 = sbr.rel (0) target = $region37
    $region36: #{policy_forward.1} parent=1 // pred_region
      _
    $region37: #{policy_forward.1} parent=1 // pred_fallthru
      _
    %276 = vsyncpa [#allocation3], 1
    %277 = vsyncpa [#allocation5], 1

</llo_original>
